<compile_context>
chip_gen: v6e
topology: v6e:2x2x1
jax: 0.10.0
libtpu: 0.0.40
codegen_flags: <defaults>
</compile_context>

<pallas_src>
import functools

import jax
import jax.numpy as jnp
from jax.experimental import pallas as pl
from jax.experimental.pallas import tpu as pltpu


def _round_up(x, m):
    return (x + m - 1) // m * m


def _largest_tile(total, pref):
    """Largest multiple of 128 that is <= max(pref, 128) and divides `total`.

    `total` must itself be a multiple of 128, so the loop terminates at 128.
    """
    t = min(total, max(128, (pref // 128) * 128))
    while total % t:
        t -= 128
    return t


def _choose_weight_tiles(k_pad, o_pad, budget_bytes=8 * 1024 * 1024):
    """Pick (tk, to) for the f32 weight block.

    Prefer keeping the whole weight resident in VMEM (patches then stream
    exactly once); otherwise prefer to = 256-multiples (v6e/v7x MXU is
    2x256x256) and the largest tk that stays inside the budget.
    """
    if k_pad * o_pad * 4 <= budget_bytes:
        return k_pad, o_pad
    to = _largest_tile(o_pad, 256)
    tk = _largest_tile(k_pad, budget_bytes // (4 * to))
    return tk, to


# ---------------------------------------------------------------------------
# Kernel: fused weight fake-quant + tiled matmul, accumulating into the f32
# output block (no scratch).  grid = (M/tm, O/to, K/tk), K last ("arbitrary").
#   scale_ref: (1,) f32 in SMEM      patches block: (tm, tk) bf16
#   weight block: (tk, to) f32       bias block: (1, to) f32
#   output block: (tm, to) f32 (block index constant over k -> accumulator)
# ---------------------------------------------------------------------------
def _quant_matmul_kernel(scale_ref, p_ref, w_ref, b_ref, o_ref, *, weight_bit):
    n = float(2 ** (weight_bit - 1) - 1)
    k = pl.program_id(2)

    @pl.when(k == 0)
    def _init():
        # bias written exactly once per output block; accumulation then
        # happens directly in the resident f32 output block (no epilogue).
        o_ref[...] = jnp.broadcast_to(b_ref[...], o_ref.shape)

    # Symmetric fake quantization of this weight tile on the VPU (exact f32
    # round-half-to-even / clip / dequant, matching torch.round), then feed
    # the MXU in bf16.  Zero padding quantizes back to exactly zero.
    scale = scale_ref[0]
    w_q = jnp.clip(jnp.round(w_ref[...] / scale), -n - 1.0, n) * scale
    o_ref[...] += jnp.dot(p_ref[...], w_q.astype(jnp.bfloat16),
                          preferred_element_type=jnp.float32)


def quant_conv2d(x, weight, bias=None, *, weight_bit=8, stride=(1, 1),
                 padding=(1, 1)):
    """NCHW input, OIHW weight (PyTorch convention) -> NCHW f32 output."""
    N, C, H, W = x.shape
    O, Cw, KH, KW = weight.shape
    assert C == Cw, "groups != 1 not supported"
    sh, sw = stride
    ph, pw = padding
    OH = (H + 2 * ph - KH) // sh + 1
    OW = (W + 2 * pw - KW) // sw + 1
    if bias is None:
        bias = jnp.zeros((O,), jnp.float32)

    weight = weight.astype(jnp.float32)

    # --- per-tensor symmetric scale: tiny XLA reduce on the unpadded weight;
    #     the clip/round/dequant itself is fused into the Pallas kernel. -----
    n_levels = float(2 ** (weight_bit - 1) - 1)
    w_min = jnp.min(weight)
    w_max = jnp.max(weight)
    scale = jnp.maximum(jnp.maximum(jnp.abs(w_min), jnp.abs(w_max)), 1e-8)
    scale = (scale / n_levels).reshape(1).astype(jnp.float32)

    Kdim = C * KH * KW
    K_pad = _round_up(Kdim, 128)          # lane-dense K, no tk over-padding
    O_pad = _round_up(O, 128)             # lane-dense (unmasked) output stores
    M = N * OH * OW

    # --- weight (O,C,KH,KW) -> (KH*KW*C, O), zero-padded, kept f32 ----------
    w_mat = jnp.transpose(weight, (2, 3, 1, 0)).reshape(Kdim, O)
    w_mat = jnp.pad(w_mat, ((0, K_pad - Kdim), (0, O_pad - O)))
    b_row = jnp.pad(bias.astype(jnp.float32).reshape(1, O),
                    ((0, 0), (0, O_pad - O)))

    # --- im2col built directly in the padded (M, K_pad) bf16 layout from an
    #     NHWC view; K order is (kh, kw, c) to match w_mat, so one concatenate
    #     replaces the old 6-D transpose + extra jnp.pad passes. -------------
    x_nhwc = jnp.transpose(x, (0, 2, 3, 1)).astype(jnp.bfloat16)
    xp = jnp.pad(x_nhwc, ((0, 0), (ph, ph), (pw, pw), (0, 0)))
    cols = [xp[:, kh:kh + sh * OH:sh, kw:kw + sw * OW:sw, :]
            for kh in range(KH) for kw in range(KW)]
    if K_pad > Kdim:
        cols.append(jnp.zeros((N, OH, OW, K_pad - Kdim), jnp.bfloat16))
    patches = jnp.concatenate(cols, axis=-1).reshape(M, K_pad)

    # --- tile sizes ----------------------------------------------------------
    if M >= 512:
        tm = 256                                   # >= 2 M-blocks
    else:
        tm = max(8, _round_up(-(-M // 2), 8))      # 2 blocks for 2-TC sharding
    M_pad = _round_up(M, tm)
    if M_pad > M:
        patches = jnp.pad(patches, ((0, M_pad - M), (0, 0)))

    tk, to = _choose_weight_tiles(K_pad, O_pad)
    grid = (M_pad // tm, O_pad // to, K_pad // tk)

    out_p = pl.pallas_call(
        functools.partial(_quant_matmul_kernel, weight_bit=weight_bit),
        out_shape=jax.ShapeDtypeStruct((M_pad, O_pad), jnp.float32),
        grid_spec=pltpu.PrefetchScalarGridSpec(
            num_scalar_prefetch=0,
            grid=grid,
            in_specs=[
                pl.BlockSpec(memory_space=pltpu.MemorySpace.SMEM),  # scale
                pl.BlockSpec((tm, tk), lambda i, j, k: (i, k)),     # patches
                pl.BlockSpec((tk, to), lambda i, j, k: (k, j)),     # weight
                pl.BlockSpec((1, to), lambda i, j, k: (0, j)),      # bias
            ],
            out_specs=pl.BlockSpec((tm, to), lambda i, j, k: (i, j)),
        ),
        compiler_params=pltpu.CompilerParams(
            dimension_semantics=("parallel", "parallel", "arbitrary"),
            # fits v7x's 64 MiB physical VMEM; plenty of headroom on v5e/v6e.
            vmem_limit_bytes=48 * 1024 * 1024,
        ),
        cost_estimate=pl.CostEstimate(
            flops=2 * M_pad * K_pad * O_pad,
            transcendentals=0,
            bytes_accessed=(2 * M_pad * K_pad + 4 * K_pad * O_pad
                            + 4 * M_pad * O_pad),
        ),
    )(scale, patches, w_mat, b_row)

    out = out_p[:M, :O].reshape(N, OH, OW, O)
    # Module semantics are NCHW.  TODO(synk): return NHWC directly when the
    # consumer allows it and skip this full-activation transpose.
    return jnp.transpose(out, (0, 3, 1, 2))


# ---------------------------------------------------------------------------
# Pure-JAX f32 reference of the same forward (sanity check).
# ---------------------------------------------------------------------------
def _reference(x, weight, bias, *, weight_bit, stride, padding):
    n = float(2 ** (weight_bit - 1) - 1)
    scale = jnp.maximum(
        jnp.maximum(jnp.abs(weight.min()), jnp.abs(weight.max())), 1e-8) / n
    w_q = jnp.clip(jnp.round(weight / scale), -n - 1.0, n) * scale
    out = jax.lax.conv_general_dilated(
        x, w_q, window_strides=stride,
        padding=[(padding[0], padding[0]), (padding[1], padding[1])],
        dimension_numbers=("NCHW", "OIHW", "NCHW"),
    )
    return out + bias[None, :, None, None]


if __name__ == "__main__":
    key = jax.random.PRNGKey(0)
    k_x, k_w, k_b = jax.random.split(key, 3)

    # small NCHW input; conv config: 4 -> 8 channels, 3x3, stride 1, pad 1
    N, C, H, W = 2, 4, 16, 16
    O, KH, KW = 8, 3, 3
    weight_bit = 8
    stride = (1, 1)
    padding = (1, 1)

    x = jax.random.normal(k_x, (N, C, H, W), dtype=jnp.float32)
    weight = jax.random.normal(k_w, (O, C, KH, KW), dtype=jnp.float32) * 0.1
    bias = jax.random.normal(k_b, (O,), dtype=jnp.float32) * 0.1

    fwd = jax.jit(functools.partial(quant_conv2d, weight_bit=weight_bit,
                                    stride=stride, padding=padding))
    out = jax.block_until_ready(fwd(x, weight, bias))

    ref = _reference(x, weight, bias, weight_bit=weight_bit,
                     stride=stride, padding=padding)
    assert out.shape == ref.shape == (N, O, H, W), (out.shape, ref.shape)
    # bf16 MXU operands (f32 accumulation) -> slightly looser tolerance than
    # the pure-f32 path.
    assert jnp.allclose(out, ref, atol=2e-2, rtol=2e-2), (
        "max abs err", float(jnp.max(jnp.abs(out - ref))))

    print("KERNEL_OK")
</pallas_src>

<mosaic_0001>
module attributes {stable_mosaic.version = 11 : i64} {
  func.func @_quant_matmul_kernel(%arg0: i32, %arg1: i32, %arg2: i32, %arg3: memref<1xf32, #tpu.memory_space<smem>>, %arg4: memref<256x128xbf16, #tpu.memory_space<vmem>>, %arg5: memref<128x128xf32, #tpu.memory_space<vmem>>, %arg6: memref<1x128xf32, #tpu.memory_space<vmem>>, %arg7: memref<256x128xf32, #tpu.memory_space<vmem>>) attributes {dimension_semantics = [#tpu.dimension_semantics<parallel>, #tpu.dimension_semantics<parallel>, #tpu.dimension_semantics<arbitrary>], iteration_bounds = array<i64: 2, 1, 1>, scalar_prefetch = 0 : i64, scratch_operands = 0 : i64, tpu.core_type = #tpu.core_type<tc>, window_params = [{transform_indices = @transform_0, window_bounds = array<i64: 1>}, {transform_indices = @transform_1, window_bounds = array<i64: 256, 128>}, {transform_indices = @transform_2, window_bounds = array<i64: 128, 128>}, {transform_indices = @transform_3, window_bounds = array<i64: 1, 128>}, {transform_indices = @transform_4, window_bounds = array<i64: 256, 128>}]} {
    %c0_i32 = arith.constant 0 : i32
    %0 = arith.cmpi eq, %arg2, %c0_i32 : i32
    %1 = arith.extui %0 : i1 to i32
    %c0_i32_0 = arith.constant 0 : i32
    %2 = arith.cmpi ne, %1, %c0_i32_0 : i32
    scf.if %2 {
      %c0_11 = arith.constant 0 : index
      %c0_12 = arith.constant 0 : index
      %20 = vector.load %arg6[%c0_11, %c0_12] : memref<1x128xf32, #tpu.memory_space<vmem>>, vector<1x128xf32>
      %21 = vector.shape_cast %20 : vector<1x128xf32> to vector<1x128xf32>
      %22 = vector.broadcast %21 : vector<1x128xf32> to vector<256x128xf32>
      %c0_13 = arith.constant 0 : index
      %c0_14 = arith.constant 0 : index
      %23 = vector.load %arg7[%c0_13, %c0_14] : memref<256x128xf32, #tpu.memory_space<vmem>>, vector<256x128xf32>
      tpu.vector_store %arg7[%c0_13, %c0_14], %22 {strides = array<i32>} : memref<256x128xf32, #tpu.memory_space<vmem>>, vector<256x128xf32>,
    } else {
    }
    %c0 = arith.constant 0 : index
    %3 = memref.load %arg3[%c0] : memref<1xf32, #tpu.memory_space<smem>>
    %c0_1 = arith.constant 0 : index
    %c0_2 = arith.constant 0 : index
    %4 = vector.load %arg5[%c0_1, %c0_2] : memref<128x128xf32, #tpu.memory_space<vmem>>, vector<128x128xf32>
    %5 = vector.broadcast %3 : f32 to vector<128x128xf32>
    %6 = arith.divf %4, %5 : vector<128x128xf32>
    %7 = math.roundeven %6 : vector<128x128xf32>
    %cst = arith.constant -1.280000e+02 : f32
    %cst_3 = arith.constant 1.270000e+02 : f32
    %8 = vector.broadcast %cst : f32 to vector<128x128xf32>
    %9 = arith.maximumf %8, %7 : vector<128x128xf32>
    %10 = vector.broadcast %cst_3 : f32 to vector<128x128xf32>
    %11 = arith.minimumf %10, %9 : vector<128x128xf32>
    %12 = vector.broadcast %3 : f32 to vector<128x128xf32>
    %13 = arith.mulf %11, %12 : vector<128x128xf32>
    %c0_4 = arith.constant 0 : index
    %c0_5 = arith.constant 0 : index
    %14 = vector.load %arg7[%c0_4, %c0_5] : memref<256x128xf32, #tpu.memory_space<vmem>>, vector<256x128xf32>
    %c0_6 = arith.constant 0 : index
    %c0_7 = arith.constant 0 : index
    %15 = vector.load %arg4[%c0_6, %c0_7] : memref<256x128xbf16, #tpu.memory_space<vmem>>, vector<256x128xbf16>
    %16 = arith.truncf %13 : vector<128x128xf32> to vector<128x128xbf16>
    %cst_8 = arith.constant dense<0.000000e+00> : vector<256x128xf32>
    %17 = tpu.matmul %15, %16, %cst_8 {dimension_numbers = #tpu.dot_dimension_numbers<[1], [0], [0], [1], [0, 0, 1, 1], [], []>} : vector<256x128xbf16>, vector<128x128xbf16>, vector<256x128xf32> -> vector<256x128xf32>
    %18 = arith.addf %14, %17 : vector<256x128xf32>
    %c0_9 = arith.constant 0 : index
    %c0_10 = arith.constant 0 : index
    %19 = vector.load %arg7[%c0_9, %c0_10] : memref<256x128xf32, #tpu.memory_space<vmem>>, vector<256x128xf32>
    tpu.vector_store %arg7[%c0_9, %c0_10], %18 {strides = array<i32>} : memref<256x128xf32, #tpu.memory_space<vmem>>, vector<256x128xf32>,
    return
  }
  func.func @transform_0(%arg0: i32, %arg1: i32, %arg2: i32) -> i32 {
    %c0_i32 = arith.constant 0 : i32
    %c0_i32_0 = arith.constant 0 : i32
    return %c0_i32 : i32
  }
  func.func @transform_1(%arg0: i32, %arg1: i32, %arg2: i32) -> (i32, i32) {
    %c0_i32 = arith.constant 0 : i32
    return %arg0, %arg2 : i32, i32
  }
  func.func @transform_2(%arg0: i32, %arg1: i32, %arg2: i32) -> (i32, i32) {
    %c0_i32 = arith.constant 0 : i32
    return %arg2, %arg1 : i32, i32
  }
  func.func @transform_3(%arg0: i32, %arg1: i32, %arg2: i32) -> (i32, i32) {
    %c0_i32 = arith.constant 0 : i32
    %c0_i32_0 = arith.constant 0 : i32
    return %c0_i32, %arg1 : i32, i32
  }
  func.func @transform_4(%arg0: i32, %arg1: i32, %arg2: i32) -> (i32, i32) {
    %c0_i32 = arith.constant 0 : i32
    return %arg0, %arg1 : i32, i32
  }
}

</mosaic_0001>

<llo_original>
// kernel: quant_conv2d.1
$region0: #{quant_conv2d.1}
  #allocation0 [shape = 'u32[]', space=smem, size = 0x4, offset = 0x4, fixed_abs, tag = 'smem constant byte address 0x4 - core index']
  #allocation1 [shape = 'u32[144,128]{1,0:T(1,128)}', space=vmem, size = 0x12000, scoped, tag = 'internal scratch']
  #allocation2 [shape = 'f32[1]{0:T(128)S(6)}', space=smem, size = 0x200, scoped, tag = 'scoped memory for quant_conv2d.1']
  %s0 = inlined_call_operand.<no memory space> [shape: f32[1], index: 0, kind: input, shape index: {}]
  %s1 = inlined_call_operand.vmem [shape: bf16[512,128], index: 1, kind: input, shape index: {}]
  %s2 = inlined_call_operand.vmem [shape: f32[128,128], index: 2, kind: input, shape index: {}]
  %s3 = inlined_call_operand.vmem [shape: f32[1,128], index: 3, kind: input, shape index: {}]
  %s4 = inlined_call_operand.vmem [shape: f32[512,128], index: 4, kind: output, shape index: {}]
  %s5 = sld [smem:[#allocation0]]
  $region53: #{quant_conv2d.1} parent=0
    _
  %s7 = ssub.s32 1, %s5
  %s8 = scalar_select 0, %s7, %s5
  %9 = sst [smem:[#allocation2]] %s0
  loop: start=0, step=1, limit=4
  $region2: #{quant_conv2d.1} parent=0 // loop_pre_header
    _
  $region3: #{quant_conv2d.1} parent=0 // loop_header
    %s11 = sphi 0, %s15
    %p12 = scmp.ge.s32.totalorder %s11, 4
    %s18 = sphi 0, %s37
    %s19 = sphi 0, %s33
    %s20 = sphi 0, %s29
    %s21 = sphi 0, %s18
    %s22 = sphi 0, %s19
    %s23 = sphi 0, %s20
    %s24 = sphi 0, %s21
    %s25 = sphi 0, %s22
    %s26 = sphi 0, %s23
    %s38 = sphi 0, %s38
    %s40 = sphi 0, %s38
    %s41 = sphi 0, %s40
    %s55 = sphi 0, %s41
    %s63 = sphi 0, %s65
    %s66 = sphi 0, %s63
    %s67 = sphi 0, %s66
    %s83 = sphi 0, %s67
    %s91 = sphi 0, %s93
    %s94 = sphi 0, %s91
    %s95 = sphi 0, %s94
    %s111 = sphi 0, %s95
    %s117 = sphi 0, %s119
    %s120 = sphi 0, %s117
    %s121 = sphi 0, %s120
    %s137 = sphi 0, %s121
    %s145 = sphi 0, %s147
    %s148 = sphi 0, %s145
    %s149 = sphi 0, %s148
    %s165 = sphi 0, %s149
  $region4: #{quant_conv2d.1} parent=0 // loop_header_branch
    %14 = sbr.rel (%p12) target = $region8
  $region5: #{quant_conv2d.1} parent=0 // loop_body
    %s16 = ssub.s32 %s11, 1
    %s17 = ssub.s32 %s11, 2
    %s27 = sadd.s32 1, %s20
    %p28 = scmp.ge.s32.totalorder %s27, 1
    %s29 = scalar_select %p28, 0, %s27
    %s30 = sadd.s32 1, %s19
    %s31 = scalar_select %p28, %s30, %s19
    %p32 = scmp.ge.s32.totalorder %s31, 1
    %s33 = scalar_select %p32, 0, %s31
    %s34 = sadd.s32 1, %s18
    %s35 = scalar_select %p32, %s34, %s18
    %p36 = scmp.ge.s32.totalorder %s35, 2
    %s37 = scalar_select %p36, 0, %s35
    %s39 = sadd.s32 %s38, 1
    %p42 = scmp.eq.s32.totalorder %s11, 1
    %p43 = scmp.ne.s32.totalorder %s38, %s40
    %p44 = scmp.eq.s32.totalorder %s11, 0
    %p45 = por %p43, %p44
    %p46 = scmp.ne.s32.totalorder %s38, %s40
    %p47 = scmp.eq.s32.totalorder %s16, 1
    %p48 = por %p46, %p47
    %p49 = scmp.ne.s32.totalorder %s40, %s41
    %p50 = scmp.eq.s32.totalorder %s16, 0
    %p51 = por %p49, %p50
    %p52 = scmp.ne.s32.totalorder %s40, %s41
    %p53 = scmp.eq.s32.totalorder %s17, 1
    %p54 = por %p52, %p53
    %p56 = scmp.ne.s32.totalorder %s41, %s55
    %p57 = scmp.eq.s32.totalorder %s17, 0
    %p58 = por %p56, %p57
    %s59 = ssub.s32 %s18, %s37
    %s60 = ssub.s32 %s20, %s29
    %s61 = sor.u32 %s59, %s60
    %p62 = scmp.eq.s32.totalorder %s61, 0
    %s64 = sadd.s32 %s63, 1
    %s65 = scalar_select %p62, %s63, %s64
    %p68 = pneg %p62
    %p69 = scmp.eq.s32.totalorder %s11, 1
    %p70 = por %p68, %p69
    %p71 = scmp.ne.s32.totalorder %s63, %s66
    %p72 = scmp.eq.s32.totalorder %s11, 0
    %p73 = por %p71, %p72
    %p74 = scmp.ne.s32.totalorder %s63, %s66
    %p75 = scmp.eq.s32.totalorder %s16, 1
    %p76 = por %p74, %p75
    %p77 = scmp.ne.s32.totalorder %s66, %s67
    %p78 = scmp.eq.s32.totalorder %s16, 0
    %p79 = por %p77, %p78
    %p80 = scmp.ne.s32.totalorder %s66, %s67
    %p81 = scmp.eq.s32.totalorder %s17, 1
    %p82 = por %p80, %p81
    %p84 = scmp.ne.s32.totalorder %s67, %s83
    %p85 = scmp.eq.s32.totalorder %s17, 0
    %p86 = por %p84, %p85
    %s87 = ssub.s32 %s20, %s29
    %s88 = ssub.s32 %s19, %s33
    %s89 = sor.u32 %s87, %s88
    %p90 = scmp.eq.s32.totalorder %s89, 0
    %s92 = sadd.s32 %s91, 1
    %s93 = scalar_select %p90, %s91, %s92
    %p96 = pneg %p90
    %p97 = scmp.eq.s32.totalorder %s11, 1
    %p98 = por %p96, %p97
    %p99 = scmp.ne.s32.totalorder %s91, %s94
    %p100 = scmp.eq.s32.totalorder %s11, 0
    %p101 = por %p99, %p100
    %p102 = scmp.ne.s32.totalorder %s91, %s94
    %p103 = scmp.eq.s32.totalorder %s16, 1
    %p104 = por %p102, %p103
    %p105 = scmp.ne.s32.totalorder %s94, %s95
    %p106 = scmp.eq.s32.totalorder %s16, 0
    %p107 = por %p105, %p106
    %p108 = scmp.ne.s32.totalorder %s94, %s95
    %p109 = scmp.eq.s32.totalorder %s17, 1
    %p110 = por %p108, %p109
    %p112 = scmp.ne.s32.totalorder %s95, %s111
    %p113 = scmp.eq.s32.totalorder %s17, 0
    %p114 = por %p112, %p113
    %s115 = ssub.s32 %s19, %s33
    %p116 = scmp.eq.s32.totalorder %s115, 0
    %s118 = sadd.s32 %s117, 1
    %s119 = scalar_select %p116, %s117, %s118
    %p122 = pneg %p116
    %p123 = scmp.eq.s32.totalorder %s11, 1
    %p124 = por %p122, %p123
    %p125 = scmp.ne.s32.totalorder %s117, %s120
    %p126 = scmp.eq.s32.totalorder %s11, 0
    %p127 = por %p125, %p126
    %p128 = scmp.ne.s32.totalorder %s117, %s120
    %p129 = scmp.eq.s32.totalorder %s16, 1
    %p130 = por %p128, %p129
    %p131 = scmp.ne.s32.totalorder %s120, %s121
    %p132 = scmp.eq.s32.totalorder %s16, 0
    %p133 = por %p131, %p132
    %p134 = scmp.ne.s32.totalorder %s120, %s121
    %p135 = scmp.eq.s32.totalorder %s17, 1
    %p136 = por %p134, %p135
    %p138 = scmp.ne.s32.totalorder %s121, %s137
    %p139 = scmp.eq.s32.totalorder %s17, 0
    %p140 = por %p138, %p139
    %s141 = ssub.s32 %s18, %s37
    %s142 = ssub.s32 %s19, %s33
    %s143 = sor.u32 %s141, %s142
    %p144 = scmp.eq.s32.totalorder %s143, 0
    %s146 = sadd.s32 %s145, 1
    %s147 = scalar_select %p144, %s145, %s146
    %p150 = pneg %p144
    %p151 = scmp.eq.s32.totalorder %s11, 1
    %p152 = por %p150, %p151
    %p153 = scmp.ne.s32.totalorder %s145, %s148
    %p154 = scmp.eq.s32.totalorder %s11, 0
    %p155 = por %p153, %p154
    %p156 = scmp.ne.s32.totalorder %s145, %s148
    %p157 = scmp.eq.s32.totalorder %s16, 1
    %p158 = por %p156, %p157
    %p159 = scmp.ne.s32.totalorder %s148, %s149
    %p160 = scmp.eq.s32.totalorder %s16, 0
    %p161 = por %p159, %p160
    %p162 = scmp.ne.s32.totalorder %s148, %s149
    %p163 = scmp.eq.s32.totalorder %s17, 1
    %p164 = por %p162, %p163
    %p166 = scmp.ne.s32.totalorder %s149, %s165
    %p167 = scmp.eq.s32.totalorder %s17, 0
    %p168 = por %p166, %p167
    %p169 = scmp.le.s32.totalorder 1, %s11
    %p170 = scmp.lt.s32.totalorder %s11, 3
    %p171 = pnand %p169, %p170
    %p172 = pneg %p171
    // Predicated region
    $region9: #{quant_conv2d.1} parent=5 // pred_check
      _
    $region10: #{quant_conv2d.1} parent=5 // pred_check_branch
      %174 = sbr.rel (%p171) target = $region12
    $region11: #{quant_conv2d.1} parent=5 // pred_region
      %s175 = ssub.s32 %s11, 1
      // Predicated region
      $region13: #{quant_conv2d.1} parent=11 // pred_check
        %p176 = pneg %p51
      $region14: #{quant_conv2d.1} parent=11 // pred_check_branch
        %178 = sbr.rel (%p176) target = $region16
      $region15: #{quant_conv2d.1} parent=11 // pred_region
        _
      $region16: #{quant_conv2d.1} parent=11 // pred_fallthru
        _
      // Predicated region
      $region17: #{quant_conv2d.1} parent=11 // pred_check
        %p179 = pneg %p107
      $region18: #{quant_conv2d.1} parent=11 // pred_check_branch
        %181 = sbr.rel (%p179) target = $region20
      $region19: #{quant_conv2d.1} parent=11 // pred_region
        %s182 = smul.u32 16, %s23
        %p183 = scmp.lt.s32.totalorder %s182, 15
        %s184 = scalar_select %p183, %s182, 15
        %p185 = scmp.lt.s32.totalorder %s22, 0
        %s186 = scalar_select %p185, %s22, 0
        %s187 = sadd.s32 %s186, %s184
        %s188 = smul.addr %s187, 8
        %s189 = scalar_lea.vmem %s2, %s188
        %s190 = smul.u32 16, %s23
      $region20: #{quant_conv2d.1} parent=11 // pred_fallthru
        _
      // Predicated region
      $region21: #{quant_conv2d.1} parent=11 // pred_check
        %p191 = pneg %p133
      $region22: #{quant_conv2d.1} parent=11 // pred_check_branch
        %193 = sbr.rel (%p191) target = $region24
      $region23: #{quant_conv2d.1} parent=11 // pred_region
        %p194 = scmp.lt.s32.totalorder %s22, 0
        %s195 = scalar_select %p194, %s22, 0
        %s196 = scalar_lea.vmem %s3, %s195
      $region24: #{quant_conv2d.1} parent=11 // pred_fallthru
        _
    $region12: #{quant_conv2d.1} parent=5 // pred_fallthru
      _
    %p197 = scmp.lt.s32.totalorder %s11, 2
    // Predicated region
    $region25: #{quant_conv2d.1} parent=5 // pred_check
      %p198 = pneg %p197
    $region26: #{quant_conv2d.1} parent=5 // pred_check_branch
      %200 = sbr.rel (%p198) target = $region28
    $region27: #{quant_conv2d.1} parent=5 // pred_region
      // Predicated region
      $region29: #{quant_conv2d.1} parent=27 // pred_check
        %p201 = pneg %p73
      $region30: #{quant_conv2d.1} parent=27 // pred_check_branch
        %203 = sbr.rel (%p201) target = $region32
      $region31: #{quant_conv2d.1} parent=27 // pred_region
        %s204 = smul.u32 32, %s18
        %p205 = scmp.lt.s32.totalorder %s204, 63
        %s206 = scalar_select %p205, %s204, 63
        %p207 = scmp.lt.s32.totalorder %s20, 0
        %s208 = scalar_select %p207, %s20, 0
        %s209 = sadd.s32 %s208, %s206
        %s210 = smul.addr %s209, 4
        %s211 = scalar_lea.vmem %s1, %s210
        %s212 = smul.u32 32, %s18
      $region32: #{quant_conv2d.1} parent=27 // pred_fallthru
        _
    $region28: #{quant_conv2d.1} parent=5 // pred_fallthru
      _
    %p213 = scmp.le.s32.totalorder 1, %s11
    %p214 = scmp.lt.s32.totalorder %s11, 3
    %p215 = pnand %p213, %p214
    %p216 = pneg %p215
    // Predicated region
    $region33: #{quant_conv2d.1} parent=5 // pred_check
      _
    $region34: #{quant_conv2d.1} parent=5 // pred_check_branch
      %218 = sbr.rel (%p215) target = $region36
    $region35: #{quant_conv2d.1} parent=5 // pred_region
      %s219 = ssub.s32 %s11, 1
      %p220 = pneg %p51
      %p221 = pneg %p48
      %s222 = smul.u32 32, %s21
      %p223 = scmp.lt.s32.totalorder %s222, 63
      %s224 = scalar_select %p223, %s222, 63
      %p225 = scmp.lt.s32.totalorder %s23, 0
      %s226 = scalar_select %p225, %s23, 0
      %s227 = sadd.s32 %s226, %s224
      %s228 = smul.addr %s227, 4
      %s229 = scalar_lea.vmem %s1, %s228
      %p230 = pneg %p79
      %p231 = pneg %p76
      %s232 = smul.u32 16, %s23
      %p233 = scmp.lt.s32.totalorder %s232, 15
      %s234 = scalar_select %p233, %s232, 15
      %p235 = scmp.lt.s32.totalorder %s22, 0
      %s236 = scalar_select %p235, %s22, 0
      %s237 = sadd.s32 %s236, %s234
      %s238 = smul.addr %s237, 8
      %s239 = scalar_lea.vmem %s2, %s238
      %p240 = pneg %p107
      %p241 = pneg %p104
      %p242 = scmp.lt.s32.totalorder %s22, 0
      %s243 = scalar_select %p242, %s22, 0
      %s244 = scalar_lea.vmem %s3, %s243
      %p245 = pneg %p133
      %p246 = pneg %p130
      %p247 = pneg %p161
      %p248 = pneg %p158
      %s249 = smul.u32 32, %s21
      %p250 = scmp.lt.s32.totalorder %s249, 63
      %s251 = scalar_select %p250, %s249, 63
      %p252 = scmp.lt.s32.totalorder %s22, 0
      %s253 = scalar_select %p252, %s22, 0
      %s254 = sadd.s32 %s253, %s251
      %s255 = smul.addr %s254, 8
      %s256 = scalar_lea.vmem %s4, %s255
      %s257 = smul.u32 32, %s21
      %p258 = scmp.lt.s32.totalorder %s257, 63
      %s259 = scalar_select %p258, %s257, 63
      %p260 = scmp.lt.s32.totalorder %s23, 0
      %s261 = scalar_select %p260, %s23, 0
      %s262 = sadd.s32 %s261, %s259
      %s263 = smul.addr %s262, 4
      %s264 = scalar_lea.vmem %s1, %s263
      %s265 = smul.u32 32, %s21
      %s266 = smul.u32 16, %s23
      %p267 = scmp.lt.s32.totalorder %s266, 15
      %s268 = scalar_select %p267, %s266, 15
      %p269 = scmp.lt.s32.totalorder %s22, 0
      %s270 = scalar_select %p269, %s22, 0
      %s271 = sadd.s32 %s270, %s268
      %s272 = smul.addr %s271, 8
      %s273 = scalar_lea.vmem %s2, %s272
      %s274 = smul.u32 16, %s23
      %p275 = scmp.lt.s32.totalorder %s22, 0
      %s276 = scalar_select %p275, %s22, 0
      %s277 = scalar_lea.vmem %s3, %s276
      %s278 = smul.u32 32, %s21
      %p279 = scmp.lt.s32.totalorder %s278, 63
      %s280 = scalar_select %p279, %s278, 63
      %p281 = scmp.lt.s32.totalorder %s22, 0
      %s282 = scalar_select %p281, %s22, 0
      %s283 = sadd.s32 %s282, %s280
      %s284 = smul.addr %s283, 8
      %s285 = scalar_lea.vmem %s4, %s284
      %s286 = smul.u32 32, %s21
      %p288 = scmp.eq.s32.totalorder %s23, 0
      // Predicated region
      $region37: #{quant_conv2d.1} parent=35 // pred_check
        %p289 = pneg %p288
      $region38: #{quant_conv2d.1} parent=35 // pred_check_branch
        %291 = sbr.rel (%p289) target = $region40
      $region39: #{quant_conv2d.1} parent=35 // pred_region
        %v292 = vld [vmem:[%s277] sm:$0x1]
        %v294 = vlaneseq
        %v295 = vshrl.u32 %v294, 7
        %v296 = vsub.s32 0, %v295
        %v297 = vrot.slane %v292, %v296
        %299 = vst [vmem:[%s285] sm:$0xff] %v297
        %300 = vst [vmem:[%s285 + $0x8] sm:$0xff] %v297
        %301 = vst [vmem:[%s285 + $0x10] sm:$0xff] %v297
        %302 = vst [vmem:[%s285 + $0x18] sm:$0xff] %v297
        %303 = vst [vmem:[%s285 + $0x20] sm:$0xff] %v297
        %304 = vst [vmem:[%s285 + $0x28] sm:$0xff] %v297
        %305 = vst [vmem:[%s285 + $0x30] sm:$0xff] %v297
        %306 = vst [vmem:[%s285 + $0x38] sm:$0xff] %v297
        %307 = vst [vmem:[%s285 + $0x40] sm:$0xff] %v297
        %308 = vst [vmem:[%s285 + $0x48] sm:$0xff] %v297
        %309 = vst [vmem:[%s285 + $0x50] sm:$0xff] %v297
        %310 = vst [vmem:[%s285 + $0x58] sm:$0xff] %v297
        %311 = vst [vmem:[%s285 + $0x60] sm:$0xff] %v297
        %312 = vst [vmem:[%s285 + $0x68] sm:$0xff] %v297
        %313 = vst [vmem:[%s285 + $0x70] sm:$0xff] %v297
        %314 = vst [vmem:[%s285 + $0x78] sm:$0xff] %v297
        %315 = vst [vmem:[%s285 + $0x80] sm:$0xff] %v297
        %316 = vst [vmem:[%s285 + $0x88] sm:$0xff] %v297
        %317 = vst [vmem:[%s285 + $0x90] sm:$0xff] %v297
        %318 = vst [vmem:[%s285 + $0x98] sm:$0xff] %v297
        %319 = vst [vmem:[%s285 + $0xa0] sm:$0xff] %v297
        %320 = vst [vmem:[%s285 + $0xa8] sm:$0xff] %v297
        %321 = vst [vmem:[%s285 + $0xb0] sm:$0xff] %v297
        %322 = vst [vmem:[%s285 + $0xb8] sm:$0xff] %v297
        %323 = vst [vmem:[%s285 + $0xc0] sm:$0xff] %v297
        %324 = vst [vmem:[%s285 + $0xc8] sm:$0xff] %v297
        %325 = vst [vmem:[%s285 + $0xd0] sm:$0xff] %v297
        %326 = vst [vmem:[%s285 + $0xd8] sm:$0xff] %v297
        %327 = vst [vmem:[%s285 + $0xe0] sm:$0xff] %v297
        %328 = vst [vmem:[%s285 + $0xe8] sm:$0xff] %v297
        %329 = vst [vmem:[%s285 + $0xf0] sm:$0xff] %v297
        %330 = vst [vmem:[%s285 + $0xf8] sm:$0xff] %v297
      $region40: #{quant_conv2d.1} parent=35 // pred_fallthru
        _
      %s331 = sld [smem:[#allocation2]]
      %v332 = vld [vmem:[%s273] sm:$0xff]
      %v333 = vld [vmem:[%s273 + $0x8] sm:$0xff]
      %v334 = vld [vmem:[%s273 + $0x10] sm:$0xff]
      %v335 = vld [vmem:[%s273 + $0x18] sm:$0xff]
      %v336 = vld [vmem:[%s273 + $0x20] sm:$0xff]
      %v337 = vld [vmem:[%s273 + $0x28] sm:$0xff]
      %v338 = vld [vmem:[%s273 + $0x30] sm:$0xff]
      %v339 = vld [vmem:[%s273 + $0x38] sm:$0xff]
      %v340 = vld [vmem:[%s273 + $0x40] sm:$0xff]
      %v341 = vld [vmem:[%s273 + $0x48] sm:$0xff]
      %v342 = vld [vmem:[%s273 + $0x50] sm:$0xff]
      %v343 = vld [vmem:[%s273 + $0x58] sm:$0xff]
      %v344 = vld [vmem:[%s273 + $0x60] sm:$0xff]
      %v345 = vld [vmem:[%s273 + $0x68] sm:$0xff]
      %v346 = vld [vmem:[%s273 + $0x70] sm:$0xff]
      %v347 = vld [vmem:[%s273 + $0x78] sm:$0xff]
      %v348 = vstv %s331
      %v349 = vrcp.pop %v348
      %v350 = vmul.f32 %v332, %v349
      %v351 = vmul.f32 %v333, %v349
      %v352 = vmul.f32 %v334, %v349
      %v353 = vmul.f32 %v335, %v349
      %v354 = vmul.f32 %v336, %v349
      %v355 = vmul.f32 %v337, %v349
      %v356 = vmul.f32 %v338, %v349
      %v357 = vmul.f32 %v339, %v349
      %v358 = vmul.f32 %v340, %v349
      %v359 = vmul.f32 %v341, %v349
      %v360 = vmul.f32 %v342, %v349
      %v361 = vmul.f32 %v343, %v349
      %v362 = vmul.f32 %v344, %v349
      %v363 = vmul.f32 %v345, %v349
      %v364 = vmul.f32 %v346, %v349
      %v365 = vmul.f32 %v347, %v349
      %v366 = vround.ne.pseudo %v350
      %v367 = vround.ne.pseudo %v351
      %v368 = vround.ne.pseudo %v352
      %v369 = vround.ne.pseudo %v353
      %v370 = vround.ne.pseudo %v354
      %v371 = vround.ne.pseudo %v355
      %v372 = vround.ne.pseudo %v356
      %v373 = vround.ne.pseudo %v357
      %v374 = vround.ne.pseudo %v358
      %v375 = vround.ne.pseudo %v359
      %v376 = vround.ne.pseudo %v360
      %v377 = vround.ne.pseudo %v361
      %v378 = vround.ne.pseudo %v362
      %v379 = vround.ne.pseudo %v363
      %v380 = vround.ne.pseudo %v364
      %v381 = vround.ne.pseudo %v365
      %v382 = vmax.f32 %v366, -128.0
      %v383 = vmax.f32 %v367, -128.0
      %v384 = vmax.f32 %v368, -128.0
      %v385 = vmax.f32 %v369, -128.0
      %v386 = vmax.f32 %v370, -128.0
      %v387 = vmax.f32 %v371, -128.0
      %v388 = vmax.f32 %v372, -128.0
      %v389 = vmax.f32 %v373, -128.0
      %v390 = vmax.f32 %v374, -128.0
      %v391 = vmax.f32 %v375, -128.0
      %v392 = vmax.f32 %v376, -128.0
      %v393 = vmax.f32 %v377, -128.0
      %v394 = vmax.f32 %v378, -128.0
      %v395 = vmax.f32 %v379, -128.0
      %v396 = vmax.f32 %v380, -128.0
      %v397 = vmax.f32 %v381, -128.0
      %v398 = vmin.f32 %v382, 127.0
      %v399 = vmin.f32 %v383, 127.0
      %v400 = vmin.f32 %v384, 127.0
      %v401 = vmin.f32 %v385, 127.0
      %v402 = vmin.f32 %v386, 127.0
      %v403 = vmin.f32 %v387, 127.0
      %v404 = vmin.f32 %v388, 127.0
      %v405 = vmin.f32 %v389, 127.0
      %v406 = vmin.f32 %v390, 127.0
      %v407 = vmin.f32 %v391, 127.0
      %v408 = vmin.f32 %v392, 127.0
      %v409 = vmin.f32 %v393, 127.0
      %v410 = vmin.f32 %v394, 127.0
      %v411 = vmin.f32 %v395, 127.0
      %v412 = vmin.f32 %v396, 127.0
      %v413 = vmin.f32 %v397, 127.0
      %v414 = vmul.f32 %v398, %v348
      %v415 = vmul.f32 %v399, %v348
      %v416 = vmul.f32 %v400, %v348
      %v417 = vmul.f32 %v401, %v348
      %v418 = vmul.f32 %v402, %v348
      %v419 = vmul.f32 %v403, %v348
      %v420 = vmul.f32 %v404, %v348
      %v421 = vmul.f32 %v405, %v348
      %v422 = vmul.f32 %v406, %v348
      %v423 = vmul.f32 %v407, %v348
      %v424 = vmul.f32 %v408, %v348
      %v425 = vmul.f32 %v409, %v348
      %v426 = vmul.f32 %v410, %v348
      %v427 = vmul.f32 %v411, %v348
      %v428 = vmul.f32 %v412, %v348
      %v429 = vmul.f32 %v413, %v348
      %v430 = vld [vmem:[%s285] sm:$0xff]
      %v431 = vld [vmem:[%s285 + $0x8] sm:$0xff]
      %v432 = vld [vmem:[%s285 + $0x10] sm:$0xff]
      %v433 = vld [vmem:[%s285 + $0x18] sm:$0xff]
      %v434 = vld [vmem:[%s285 + $0x20] sm:$0xff]
      %v435 = vld [vmem:[%s285 + $0x28] sm:$0xff]
      %v436 = vld [vmem:[%s285 + $0x30] sm:$0xff]
      %v437 = vld [vmem:[%s285 + $0x38] sm:$0xff]
      %v438 = vld [vmem:[%s285 + $0x40] sm:$0xff]
      %v439 = vld [vmem:[%s285 + $0x48] sm:$0xff]
      %v440 = vld [vmem:[%s285 + $0x50] sm:$0xff]
      %v441 = vld [vmem:[%s285 + $0x58] sm:$0xff]
      %v442 = vld [vmem:[%s285 + $0x60] sm:$0xff]
      %v443 = vld [vmem:[%s285 + $0x68] sm:$0xff]
      %v444 = vld [vmem:[%s285 + $0x70] sm:$0xff]
      %v445 = vld [vmem:[%s285 + $0x78] sm:$0xff]
      %v446 = vld [vmem:[%s285 + $0x80] sm:$0xff]
      %v447 = vld [vmem:[%s285 + $0x88] sm:$0xff]
      %v448 = vld [vmem:[%s285 + $0x90] sm:$0xff]
      %v449 = vld [vmem:[%s285 + $0x98] sm:$0xff]
      %v450 = vld [vmem:[%s285 + $0xa0] sm:$0xff]
      %v451 = vld [vmem:[%s285 + $0xa8] sm:$0xff]
      %v452 = vld [vmem:[%s285 + $0xb0] sm:$0xff]
      %v453 = vld [vmem:[%s285 + $0xb8] sm:$0xff]
      %v454 = vld [vmem:[%s285 + $0xc0] sm:$0xff]
      %v455 = vld [vmem:[%s285 + $0xc8] sm:$0xff]
      %v456 = vld [vmem:[%s285 + $0xd0] sm:$0xff]
      %v457 = vld [vmem:[%s285 + $0xd8] sm:$0xff]
      %v458 = vld [vmem:[%s285 + $0xe0] sm:$0xff]
      %v459 = vld [vmem:[%s285 + $0xe8] sm:$0xff]
      %v460 = vld [vmem:[%s285 + $0xf0] sm:$0xff]
      %v461 = vld [vmem:[%s285 + $0xf8] sm:$0xff]
      %v462 = vld [vmem:[%s264] sm:$0xf]
      %v463 = vld [vmem:[%s264 + $0x4] sm:$0xf]
      %v464 = vld [vmem:[%s264 + $0x8] sm:$0xf]
      %v465 = vld [vmem:[%s264 + $0xc] sm:$0xf]
      %v466 = vld [vmem:[%s264 + $0x10] sm:$0xf]
      %v467 = vld [vmem:[%s264 + $0x14] sm:$0xf]
      %v468 = vld [vmem:[%s264 + $0x18] sm:$0xf]
      %v469 = vld [vmem:[%s264 + $0x1c] sm:$0xf]
      %v470 = vld [vmem:[%s264 + $0x20] sm:$0xf]
      %v471 = vld [vmem:[%s264 + $0x24] sm:$0xf]
      %v472 = vld [vmem:[%s264 + $0x28] sm:$0xf]
      %v473 = vld [vmem:[%s264 + $0x2c] sm:$0xf]
      %v474 = vld [vmem:[%s264 + $0x30] sm:$0xf]
      %v475 = vld [vmem:[%s264 + $0x34] sm:$0xf]
      %v476 = vld [vmem:[%s264 + $0x38] sm:$0xf]
      %v477 = vld [vmem:[%s264 + $0x3c] sm:$0xf]
      %v478 = vld [vmem:[%s264 + $0x40] sm:$0xf]
      %v479 = vld [vmem:[%s264 + $0x44] sm:$0xf]
      %v480 = vld [vmem:[%s264 + $0x48] sm:$0xf]
      %v481 = vld [vmem:[%s264 + $0x4c] sm:$0xf]
      %v482 = vld [vmem:[%s264 + $0x50] sm:$0xf]
      %v483 = vld [vmem:[%s264 + $0x54] sm:$0xf]
      %v484 = vld [vmem:[%s264 + $0x58] sm:$0xf]
      %v485 = vld [vmem:[%s264 + $0x5c] sm:$0xf]
      %v486 = vld [vmem:[%s264 + $0x60] sm:$0xf]
      %v487 = vld [vmem:[%s264 + $0x64] sm:$0xf]
      %v488 = vld [vmem:[%s264 + $0x68] sm:$0xf]
      %v489 = vld [vmem:[%s264 + $0x6c] sm:$0xf]
      %v490 = vld [vmem:[%s264 + $0x70] sm:$0xf]
      %v491 = vld [vmem:[%s264 + $0x74] sm:$0xf]
      %v492 = vld [vmem:[%s264 + $0x78] sm:$0xf]
      %v493 = vld [vmem:[%s264 + $0x7c] sm:$0xf]
      %v494 = vpack.c.bf16 %v415, %v414
      %v495 = vpack.c.bf16 %v417, %v416
      %v496 = vpack.c.bf16 %v419, %v418
      %v497 = vpack.c.bf16 %v421, %v420
      %v498 = vpack.c.bf16 %v423, %v422
      %v499 = vpack.c.bf16 %v425, %v424
      %v500 = vpack.c.bf16 %v427, %v426
      %v501 = vpack.c.bf16 %v429, %v428
      %v534 = vunpack.c.l.b16 %v462
      %v535 = vunpack.c.l.b16 %v463
      %v536 = vunpack.c.l.b16 %v464
      %v537 = vunpack.c.l.b16 %v465
      %v538 = vunpack.c.l.b16 %v466
      %v539 = vunpack.c.l.b16 %v467
      %v540 = vunpack.c.l.b16 %v468
      %v541 = vunpack.c.l.b16 %v469
      %v542 = vunpack.c.l.b16 %v470
      %v543 = vunpack.c.l.b16 %v471
      %v544 = vunpack.c.l.b16 %v472
      %v545 = vunpack.c.l.b16 %v473
      %v546 = vunpack.c.l.b16 %v474
      %v547 = vunpack.c.l.b16 %v475
      %v548 = vunpack.c.l.b16 %v476
      %v549 = vunpack.c.l.b16 %v477
      %v550 = vunpack.c.l.b16 %v478
      %v551 = vunpack.c.l.b16 %v479
      %v552 = vunpack.c.l.b16 %v480
      %v553 = vunpack.c.l.b16 %v481
      %v554 = vunpack.c.l.b16 %v482
      %v555 = vunpack.c.l.b16 %v483
      %v556 = vunpack.c.l.b16 %v484
      %v557 = vunpack.c.l.b16 %v485
      %v558 = vunpack.c.l.b16 %v486
      %v559 = vunpack.c.l.b16 %v487
      %v560 = vunpack.c.l.b16 %v488
      %v561 = vunpack.c.l.b16 %v489
      %v562 = vunpack.c.l.b16 %v490
      %v563 = vunpack.c.l.b16 %v491
      %v564 = vunpack.c.l.b16 %v492
      %v565 = vunpack.c.l.b16 %v493
      %v566 = vpack.c.b16 %v535, %v534
      %v567 = vpack.c.b16 %v537, %v536
      %v568 = vpack.c.b16 %v539, %v538
      %v569 = vpack.c.b16 %v541, %v540
      %v570 = vpack.c.b16 %v543, %v542
      %v571 = vpack.c.b16 %v545, %v544
      %v572 = vpack.c.b16 %v547, %v546
      %v573 = vpack.c.b16 %v549, %v548
      %v574 = vpack.c.b16 %v551, %v550
      %v575 = vpack.c.b16 %v553, %v552
      %v576 = vpack.c.b16 %v555, %v554
      %v577 = vpack.c.b16 %v557, %v556
      %v578 = vpack.c.b16 %v559, %v558
      %v579 = vpack.c.b16 %v561, %v560
      %v580 = vpack.c.b16 %v563, %v562
      %v581 = vpack.c.b16 %v565, %v564
      %598 = vmatprep.subr.bf16.mxu0 0
      %599 = vmatpush1.bf16.msra.mxu0 %v501
      %600 = vmatprep.subr.bf16.mxu0 0
      %601 = vmatpush1.bf16.msra.mxu0 %v500
      %602 = vmatprep.subr.bf16.mxu0 0
      %603 = vmatpush1.bf16.msra.mxu0 %v499
      %604 = vmatprep.subr.bf16.mxu0 0
      %605 = vmatpush1.bf16.msra.mxu0 %v498
      %606 = vmatprep.subr.bf16.mxu0 0
      %607 = vmatpush1.bf16.msra.mxu0 %v497
      %608 = vmatprep.subr.bf16.mxu0 0
      %609 = vmatpush1.bf16.msra.mxu0 %v496
      %610 = vmatprep.subr.bf16.mxu0 0
      %611 = vmatpush1.bf16.msra.mxu0 %v495
      %612 = vmatprep.subr.bf16.mxu0 0
      %613 = vmatpush1.bf16.msra.mxu0 %v494
      %614 = vmatprep.subr.bf16.mxu0 0
      %615 = vmatpush2.bf16.msra.mxu0 0
      %616 = vmatprep.subr.bf16.mxu0 0
      %617 = vmatpush2.bf16.msra.mxu0 0
      %618 = vmatprep.subr.bf16.mxu0 0
      %619 = vmatpush2.bf16.msra.mxu0 0
      %620 = vmatprep.subr.bf16.mxu0 0
      %621 = vmatpush2.bf16.msra.mxu0 0
      %622 = vmatprep.subr.bf16.mxu0 0
      %623 = vmatpush2.bf16.msra.mxu0 0
      %624 = vmatprep.subr.bf16.mxu0 0
      %625 = vmatpush2.bf16.msra.mxu0 0
      %626 = vmatprep.subr.bf16.mxu0 0
      %627 = vmatpush2.bf16.msra.mxu0 0
      %628 = vmatprep.subr.bf16.mxu0 0
      %629 = vmatpush2.bf16.msra.mxu0 0
      %630 = vmatprep.mubr.bf16.mxu0 0
      %631 = vmatmul.mubr.bf16.gmra.mxu0 %v566
      %v632 = vpop.f32.mrf.mxu0
      %v633 = vadd.f32 0.0, %v632
      %v634 = vpop.f32.mrf.mxu0
      %v635 = vpop.f32.mrf.mxu0
      %v636 = vadd.f32 0.0, %v635
      %v637 = vpop.f32.mrf.mxu0
      %638 = vmatprep.mubr.bf16.mxu0 0
      %639 = vmatmul.mubr.bf16.gmra.mxu0 %v567
      %v640 = vpop.f32.mrf.mxu0
      %v641 = vadd.f32 0.0, %v640
      %v642 = vpop.f32.mrf.mxu0
      %v643 = vpop.f32.mrf.mxu0
      %v644 = vadd.f32 0.0, %v643
      %v645 = vpop.f32.mrf.mxu0
      %646 = vmatprep.mubr.bf16.mxu0 0
      %647 = vmatmul.mubr.bf16.gmra.mxu0 %v568
      %v648 = vpop.f32.mrf.mxu0
      %v649 = vadd.f32 0.0, %v648
      %v650 = vpop.f32.mrf.mxu0
      %v651 = vpop.f32.mrf.mxu0
      %v652 = vadd.f32 0.0, %v651
      %v653 = vpop.f32.mrf.mxu0
      %654 = vmatprep.mubr.bf16.mxu0 0
      %655 = vmatmul.mubr.bf16.gmra.mxu0 %v569
      %v656 = vpop.f32.mrf.mxu0
      %v657 = vadd.f32 0.0, %v656
      %v658 = vpop.f32.mrf.mxu0
      %v659 = vpop.f32.mrf.mxu0
      %v660 = vadd.f32 0.0, %v659
      %v661 = vpop.f32.mrf.mxu0
      %662 = vmatprep.mubr.bf16.mxu0 0
      %663 = vmatmul.mubr.bf16.gmra.mxu0 %v570
      %v664 = vpop.f32.mrf.mxu0
      %v665 = vadd.f32 0.0, %v664
      %v666 = vpop.f32.mrf.mxu0
      %v667 = vpop.f32.mrf.mxu0
      %v668 = vadd.f32 0.0, %v667
      %v669 = vpop.f32.mrf.mxu0
      %670 = vmatprep.mubr.bf16.mxu0 0
      %671 = vmatmul.mubr.bf16.gmra.mxu0 %v571
      %v672 = vpop.f32.mrf.mxu0
      %v673 = vadd.f32 0.0, %v672
      %v674 = vpop.f32.mrf.mxu0
      %v675 = vpop.f32.mrf.mxu0
      %v676 = vadd.f32 0.0, %v675
      %v677 = vpop.f32.mrf.mxu0
      %678 = vmatprep.mubr.bf16.mxu0 0
      %679 = vmatmul.mubr.bf16.gmra.mxu0 %v572
      %v680 = vpop.f32.mrf.mxu0
      %v681 = vadd.f32 0.0, %v680
      %v682 = vpop.f32.mrf.mxu0
      %v683 = vpop.f32.mrf.mxu0
      %v684 = vadd.f32 0.0, %v683
      %v685 = vpop.f32.mrf.mxu0
      %686 = vmatprep.mubr.bf16.mxu0 0
      %687 = vmatmul.mubr.bf16.gmra.mxu0 %v573
      %v688 = vpop.f32.mrf.mxu0
      %v689 = vadd.f32 0.0, %v688
      %v690 = vpop.f32.mrf.mxu0
      %v691 = vpop.f32.mrf.mxu0
      %v692 = vadd.f32 0.0, %v691
      %v693 = vpop.f32.mrf.mxu0
      %694 = vmatprep.mubr.bf16.mxu0 0
      %695 = vmatmul.mubr.bf16.gmra.mxu0 %v574
      %v696 = vpop.f32.mrf.mxu0
      %v697 = vadd.f32 0.0, %v696
      %v698 = vpop.f32.mrf.mxu0
      %v699 = vpop.f32.mrf.mxu0
      %v700 = vadd.f32 0.0, %v699
      %v701 = vpop.f32.mrf.mxu0
      %702 = vmatprep.mubr.bf16.mxu0 0
      %703 = vmatmul.mubr.bf16.gmra.mxu0 %v575
      %v704 = vpop.f32.mrf.mxu0
      %v705 = vadd.f32 0.0, %v704
      %v706 = vpop.f32.mrf.mxu0
      %v707 = vpop.f32.mrf.mxu0
      %v708 = vadd.f32 0.0, %v707
      %v709 = vpop.f32.mrf.mxu0
      %710 = vmatprep.mubr.bf16.mxu0 0
      %711 = vmatmul.mubr.bf16.gmra.mxu0 %v576
      %v712 = vpop.f32.mrf.mxu0
      %v713 = vadd.f32 0.0, %v712
      %v714 = vpop.f32.mrf.mxu0
      %v715 = vpop.f32.mrf.mxu0
      %v716 = vadd.f32 0.0, %v715
      %v717 = vpop.f32.mrf.mxu0
      %718 = vmatprep.mubr.bf16.mxu0 0
      %719 = vmatmul.mubr.bf16.gmra.mxu0 %v577
      %v720 = vpop.f32.mrf.mxu0
      %v721 = vadd.f32 0.0, %v720
      %v722 = vpop.f32.mrf.mxu0
      %v723 = vpop.f32.mrf.mxu0
      %v724 = vadd.f32 0.0, %v723
      %v725 = vpop.f32.mrf.mxu0
      %726 = vmatprep.mubr.bf16.mxu0 0
      %727 = vmatmul.mubr.bf16.gmra.mxu0 %v578
      %v728 = vpop.f32.mrf.mxu0
      %v729 = vadd.f32 0.0, %v728
      %v730 = vpop.f32.mrf.mxu0
      %v731 = vpop.f32.mrf.mxu0
      %v732 = vadd.f32 0.0, %v731
      %v733 = vpop.f32.mrf.mxu0
      %734 = vmatprep.mubr.bf16.mxu0 0
      %735 = vmatmul.mubr.bf16.gmra.mxu0 %v579
      %v736 = vpop.f32.mrf.mxu0
      %v737 = vadd.f32 0.0, %v736
      %v738 = vpop.f32.mrf.mxu0
      %v739 = vpop.f32.mrf.mxu0
      %v740 = vadd.f32 0.0, %v739
      %v741 = vpop.f32.mrf.mxu0
      %742 = vmatprep.mubr.bf16.mxu0 0
      %743 = vmatmul.mubr.bf16.gmra.mxu0 %v580
      %v744 = vpop.f32.mrf.mxu0
      %v745 = vadd.f32 0.0, %v744
      %v746 = vpop.f32.mrf.mxu0
      %v747 = vpop.f32.mrf.mxu0
      %v748 = vadd.f32 0.0, %v747
      %v749 = vpop.f32.mrf.mxu0
      %750 = vmatprep.mubr.bf16.mxu0 0
      %751 = vmatmul.mubr.bf16.gmra.mxu0 %v581
      %v752 = vpop.f32.mrf.mxu0
      %v753 = vadd.f32 0.0, %v752
      %v754 = vpop.f32.mrf.mxu0
      %v755 = vpop.f32.mrf.mxu0
      %v756 = vadd.f32 0.0, %v755
      %v757 = vpop.f32.mrf.mxu0
      %758 = vdwg.mxu0
      %v759 = vadd.f32 %v430, %v633
      %v760 = vadd.f32 %v431, %v636
      %v761 = vadd.f32 %v432, %v641
      %v762 = vadd.f32 %v433, %v644
      %v763 = vadd.f32 %v434, %v649
      %v764 = vadd.f32 %v435, %v652
      %v765 = vadd.f32 %v436, %v657
      %v766 = vadd.f32 %v437, %v660
      %v767 = vadd.f32 %v438, %v665
      %v768 = vadd.f32 %v439, %v668
      %v769 = vadd.f32 %v440, %v673
      %v770 = vadd.f32 %v441, %v676
      %v771 = vadd.f32 %v442, %v681
      %v772 = vadd.f32 %v443, %v684
      %v773 = vadd.f32 %v444, %v689
      %v774 = vadd.f32 %v445, %v692
      %v775 = vadd.f32 %v446, %v697
      %v776 = vadd.f32 %v447, %v700
      %v777 = vadd.f32 %v448, %v705
      %v778 = vadd.f32 %v449, %v708
      %v779 = vadd.f32 %v450, %v713
      %v780 = vadd.f32 %v451, %v716
      %v781 = vadd.f32 %v452, %v721
      %v782 = vadd.f32 %v453, %v724
      %v783 = vadd.f32 %v454, %v729
      %v784 = vadd.f32 %v455, %v732
      %v785 = vadd.f32 %v456, %v737
      %v786 = vadd.f32 %v457, %v740
      %v787 = vadd.f32 %v458, %v745
      %v788 = vadd.f32 %v459, %v748
      %v789 = vadd.f32 %v460, %v753
      %v790 = vadd.f32 %v461, %v756
      %791 = vst [vmem:[%s285] sm:$0xff] %v759
      %792 = vst [vmem:[%s285 + $0x8] sm:$0xff] %v760
      %793 = vst [vmem:[%s285 + $0x10] sm:$0xff] %v761
      %794 = vst [vmem:[%s285 + $0x18] sm:$0xff] %v762
      %795 = vst [vmem:[%s285 + $0x20] sm:$0xff] %v763
      %796 = vst [vmem:[%s285 + $0x28] sm:$0xff] %v764
      %797 = vst [vmem:[%s285 + $0x30] sm:$0xff] %v765
      %798 = vst [vmem:[%s285 + $0x38] sm:$0xff] %v766
      %799 = vst [vmem:[%s285 + $0x40] sm:$0xff] %v767
      %800 = vst [vmem:[%s285 + $0x48] sm:$0xff] %v768
      %801 = vst [vmem:[%s285 + $0x50] sm:$0xff] %v769
      %802 = vst [vmem:[%s285 + $0x58] sm:$0xff] %v770
      %803 = vst [vmem:[%s285 + $0x60] sm:$0xff] %v771
      %804 = vst [vmem:[%s285 + $0x68] sm:$0xff] %v772
      %805 = vst [vmem:[%s285 + $0x70] sm:$0xff] %v773
      %806 = vst [vmem:[%s285 + $0x78] sm:$0xff] %v774
      %807 = vst [vmem:[%s285 + $0x80] sm:$0xff] %v775
      %808 = vst [vmem:[%s285 + $0x88] sm:$0xff] %v776
      %809 = vst [vmem:[%s285 + $0x90] sm:$0xff] %v777
      %810 = vst [vmem:[%s285 + $0x98] sm:$0xff] %v778
      %811 = vst [vmem:[%s285 + $0xa0] sm:$0xff] %v779
      %812 = vst [vmem:[%s285 + $0xa8] sm:$0xff] %v780
      %813 = vst [vmem:[%s285 + $0xb0] sm:$0xff] %v781
      %814 = vst [vmem:[%s285 + $0xb8] sm:$0xff] %v782
      %815 = vst [vmem:[%s285 + $0xc0] sm:$0xff] %v783
      %816 = vst [vmem:[%s285 + $0xc8] sm:$0xff] %v784
      %817 = vst [vmem:[%s285 + $0xd0] sm:$0xff] %v785
      %818 = vst [vmem:[%s285 + $0xd8] sm:$0xff] %v786
      %819 = vst [vmem:[%s285 + $0xe0] sm:$0xff] %v787
      %820 = vst [vmem:[%s285 + $0xe8] sm:$0xff] %v788
      %821 = vst [vmem:[%s285 + $0xf0] sm:$0xff] %v789
      %822 = vst [vmem:[%s285 + $0xf8] sm:$0xff] %v790
      %s823 = smul.u32 32, %s21
      %p824 = scmp.lt.s32.totalorder %s823, 63
      %s825 = scalar_select %p824, %s823, 63
      %p826 = scmp.lt.s32.totalorder %s22, 0
      %s827 = scalar_select %p826, %s22, 0
      %s828 = sadd.s32 %s827, %s825
      %s829 = smul.addr %s828, 8
      %s830 = scalar_lea.vmem %s4, %s829
      // Predicated region
      $region41: #{quant_conv2d.1} parent=35 // pred_check
        %p831 = pneg %p158
      $region42: #{quant_conv2d.1} parent=35 // pred_check_branch
        %833 = sbr.rel (%p831) target = $region44
      $region43: #{quant_conv2d.1} parent=35 // pred_region
        %s834 = smul.u32 32, %s21
      $region44: #{quant_conv2d.1} parent=35 // pred_fallthru
        _
    $region36: #{quant_conv2d.1} parent=5 // pred_fallthru
      _
    %p835 = scmp.le.s32.totalorder 2, %s11
    // Predicated region
    $region45: #{quant_conv2d.1} parent=5 // pred_check
      %p836 = pneg %p835
    $region46: #{quant_conv2d.1} parent=5 // pred_check_branch
      %838 = sbr.rel (%p836) target = $region48
    $region47: #{quant_conv2d.1} parent=5 // pred_region
      %s839 = ssub.s32 %s11, 2
      // Predicated region
      $region49: #{quant_conv2d.1} parent=47 // pred_check
        %p840 = pneg %p164
      $region50: #{quant_conv2d.1} parent=47 // pred_check_branch
        %842 = sbr.rel (%p840) target = $region52
      $region51: #{quant_conv2d.1} parent=47 // pred_region
        %s843 = smul.u32 32, %s24
        %p844 = scmp.lt.s32.totalorder %s843, 63
        %s845 = scalar_select %p844, %s843, 63
        %p846 = scmp.lt.s32.totalorder %s25, 0
        %s847 = scalar_select %p846, %s25, 0
        %s848 = sadd.s32 %s847, %s845
        %s849 = smul.addr %s848, 8
        %s850 = scalar_lea.vmem %s4, %s849
      $region52: #{quant_conv2d.1} parent=47 // pred_fallthru
        _
    $region48: #{quant_conv2d.1} parent=5 // pred_fallthru
      _
  $region6: #{quant_conv2d.1} parent=0 // loop_footer
    %s15 = sadd.s32 1, %s11
  $region7: #{quant_conv2d.1} parent=0 // loop_footer_branch
    %10 = sbr.rel target = $region3
  $region8: #{quant_conv2d.1} parent=0 // loop_exit
    _

</llo_original>
